<compile_context>
chip_gen: v5e
topology: v5e:2x2
jax: 0.10.0
libtpu: 0.0.40
codegen_flags: <defaults>
</compile_context>

<pallas_src>
import functools

import jax
import jax.numpy as jnp
from jax import lax
from jax.experimental import pallas as pl
from jax.experimental.pallas import tpu as pltpu


def _round_up(n, m):
    return ((n + m - 1) // m) * m


def _pad_to(a, shape):
    pads = [(0, t - s) for s, t in zip(a.shape, shape)]
    return jnp.pad(a, pads)


# ---------------------------------------------------------------------------
# Stage 1: fused QKV projection (weights pre-transposed to (K, N)).
# ---------------------------------------------------------------------------
def _qkv_proj_kernel(x_ref, w_ref, b_ref, q_ref, k_ref, v_ref, *, dq, dv):
    # x: (tm, d_in_p) f32/bf16 ; w: (d_in_p, 2*dq+dv) bf16 ; b: (1, 2*dq+dv) f32
    xb = x_ref[...].astype(jnp.bfloat16)           # cast in-kernel (VPU, cheap)
    acc = jnp.dot(xb, w_ref[...], preferred_element_type=jnp.float32)
    acc = acc + b_ref[...]                          # broadcast bias over rows
    # Slices are at 128-aligned lane offsets -> cheap.
    q_ref[...] = acc[:, :dq].astype(q_ref.dtype)            # scale pre-folded
    k_ref[...] = acc[:, dq:2 * dq].astype(k_ref.dtype)
    v_ref[...] = acc[:, 2 * dq:].astype(v_ref.dtype)


# ---------------------------------------------------------------------------
# Stage 2: flash-attention (online softmax over KV tiles).
# ---------------------------------------------------------------------------
def _flash_attn_kernel(q_ref, k_ref, v_ref, o_ref, m_sc, l_sc, acc_sc,
                       *, s_actual, s_padded):
    ki = pl.program_id(2)

    @pl.when(ki == 0)
    def _():
        m_sc[...] = jnp.full_like(m_sc, -1e30)
        l_sc[...] = jnp.zeros_like(l_sc)
        acc_sc[...] = jnp.zeros_like(acc_sc)

    # Scores for this (q-tile, kv-tile): (tq, tk) f32, bf16 MXU operands.
    s = lax.dot_general(q_ref[...], k_ref[...], (((1,), (1,)), ((), ())),
                        preferred_element_type=jnp.float32)

    # Sequence-padding mask, gated at TRACE time: skipped when S == s_pad.
    # Correctness relies on s_pad - S < tk so every KV tile has >=1 valid col.
    if s_actual != s_padded:
        tk = s.shape[1]
        col = lax.broadcasted_iota(jnp.int32, s.shape, 1) + ki * tk
        s = jnp.where(col < s_actual, s, -1e30)

    # Lane-replicated running max / denom: (tq, 128).
    m_prev = m_sc[...]
    l_prev = l_sc[...]
    m_cur = jnp.max(s, axis=-1, keepdims=True)            # (tq, 1) XLU reduce
    m_new = jnp.maximum(m_prev, m_cur)                     # (tq, 128)
    alpha = jnp.exp(m_prev - m_new)                        # (tq, 128) EUP
    p = jnp.exp(s - m_new[:, :1])                          # (tq, tk) f32
    l_sc[...] = alpha * l_prev + jnp.sum(p, axis=-1, keepdims=True)
    if acc_sc.shape[-1] == alpha.shape[-1]:
        alpha_o = alpha                                    # dv == 128, direct
    else:
        alpha_o = jnp.broadcast_to(alpha[:, :1], acc_sc.shape)
    acc_sc[...] = alpha_o * acc_sc[...] + jnp.dot(
        p.astype(v_ref.dtype), v_ref[...], preferred_element_type=jnp.float32)
    m_sc[...] = m_new

    @pl.when(ki == pl.num_programs(2) - 1)
    def _():
        inv = pl.reciprocal(l_sc[...], approx=False)       # EUP, same slot
        if acc_sc.shape[-1] == inv.shape[-1]:
            scale = inv
        else:
            scale = jnp.broadcast_to(inv[:, :1], acc_sc.shape)
        o_ref[...] = (acc_sc[...] * scale).astype(o_ref.dtype)


# ---------------------------------------------------------------------------
# VMEM budgeting helpers (review: size vmem_limit to the actual need).
# ---------------------------------------------------------------------------
def _vmem_bytes_stage1(tm, d_in_p, dq, dv, x_bytes):
    blocks = 2 * (tm * d_in_p * x_bytes + tm * (2 * dq + dv) * 2)   # dbl-buf
    weights = (2 * dq + dv) * d_in_p * 2 + (2 * dq + dv) * 4
    temps = tm * (2 * dq + dv) * 4                                   # f32 acc
    return blocks + weights + temps


def _vmem_bytes_stage2(tq, tk, dq, dv):
    blocks = 2 * (tq * dq * 2 + tk * dq * 2 + tk * dv * 2 + tq * dv * 2)
    scratch = 2 * tq * 128 * 4 + tq * dv * 4
    temps = 2 * tq * tk * 4                                          # s and p
    return blocks + scratch + temps


def _vmem_limit(est):
    # 2x headroom, >=32 MiB, capped at 48 MiB (safe on v7x's 64 MiB VMEM).
    return int(min(max(2 * est, 32 * 1024 * 1024), 48 * 1024 * 1024))


# ---------------------------------------------------------------------------
# Wrapper.
# ---------------------------------------------------------------------------
def self_attention(x, wq, bq, wk, bk, wv, bv):
    """x: (B, S, d_in) f32; W*: (d_out, d_in); b*: (d_out,).  Returns f32."""
    B, S, d_in = x.shape
    d_kq = wq.shape[0]
    d_v = wv.shape[0]

    # Lane-dense padded dims.
    d_in_p = _round_up(d_in, 128)
    dq = _round_up(d_kq, 128)
    dv = _round_up(d_v, 128)

    # ---- Stage-2 sequence tiling (large tiles: K/V refetch scales with n_q).
    if S <= 1024:
        s_pad = _round_up(S, 8)
        tq = tk = s_pad
        # v7x has 2 TensorCores: if batch alone can't fill both, split q axis.
        if B == 1 and s_pad >= 256 and s_pad % 16 == 0:
            tq = s_pad // 2
    else:
        s_pad = _round_up(S, 1024)
        tq, tk = 1024, 1024
    # Masking invariant: every KV tile must contain >=1 valid column.
    assert s_pad - S < tk, "padding mask requires s_pad - S < tk"

    scale = 1.0 / (d_kq ** 0.5)

    # Pad weights / biases, fold the softmax scale into the Q projection, and
    # pre-transpose to (d_in_p, 3*128) for a canonical (M,K)@(K,N) MXU matmul.
    wq_p = _pad_to(wq * scale, (dq, d_in_p))
    wk_p = _pad_to(wk, (dq, d_in_p))
    wv_p = _pad_to(wv, (dv, d_in_p))
    w_cat = jnp.concatenate([wq_p, wk_p, wv_p], axis=0)
    w_cat_t = jnp.transpose(w_cat).astype(jnp.bfloat16)       # (d_in_p, 3*128)
    b_cat = jnp.concatenate([
        _pad_to(bq * scale, (dq,)), _pad_to(bk, (dq,)), _pad_to(bv, (dv,)),
    ]).reshape(1, 2 * dq + dv).astype(jnp.float32)

    # Only materialize a padded copy of x when actually needed; the in-kernel
    # bf16 cast handles either dtype.
    if d_in == d_in_p and S == s_pad:
        x2d = x.reshape(B * s_pad, d_in_p)                    # f32, no pad pass
    else:
        x2d = _pad_to(x, (B, s_pad, d_in_p)).astype(jnp.bfloat16)
        x2d = x2d.reshape(B * s_pad, d_in_p)

    # ---- Stage-1 row tiling (large tm: stage 1 was grid-step-overhead bound).
    M = B * s_pad
    if M <= 1024:
        tm = M
    elif M % 1024 == 0:
        tm = 1024
    elif 512 <= s_pad <= 1024:
        tm = s_pad
    elif M % 512 == 0:
        tm = 512
    elif M % 256 == 0:
        tm = 256
    else:
        tm = s_pad        # always divides M and is a multiple of 8

    compiler_params_1 = pltpu.CompilerParams(
        dimension_semantics=("parallel",),
        vmem_limit_bytes=_vmem_limit(
            _vmem_bytes_stage1(tm, d_in_p, dq, dv, x2d.dtype.itemsize)))

    q2d, k2d, v2d = pl.pallas_call(
        functools.partial(_qkv_proj_kernel, dq=dq, dv=dv),
        out_shape=(jax.ShapeDtypeStruct((M, dq), jnp.bfloat16),
                   jax.ShapeDtypeStruct((M, dq), jnp.bfloat16),
                   jax.ShapeDtypeStruct((M, dv), jnp.bfloat16)),
        grid_spec=pltpu.PrefetchScalarGridSpec(
            num_scalar_prefetch=0,
            grid=(M // tm,),
            in_specs=[
                pl.BlockSpec((tm, d_in_p), lambda i: (i, 0)),           # x
                pl.BlockSpec((d_in_p, 2 * dq + dv), lambda i: (0, 0)),  # W^T
                pl.BlockSpec((1, 2 * dq + dv), lambda i: (0, 0)),       # b cat
            ],
            out_specs=(
                pl.BlockSpec((tm, dq), lambda i: (i, 0)),
                pl.BlockSpec((tm, dq), lambda i: (i, 0)),
                pl.BlockSpec((tm, dv), lambda i: (i, 0)),
            ),
        ),
        compiler_params=compiler_params_1,
    )(x2d, w_cat_t, b_cat)

    q = q2d.reshape(B, s_pad, dq)
    k = k2d.reshape(B, s_pad, dq)
    v = v2d.reshape(B, s_pad, dv)

    n_q = s_pad // tq
    n_kv = s_pad // tk

    compiler_params_2 = pltpu.CompilerParams(
        dimension_semantics=("parallel", "parallel", "arbitrary"),
        vmem_limit_bytes=_vmem_limit(_vmem_bytes_stage2(tq, tk, dq, dv)))

    out_p = pl.pallas_call(
        functools.partial(_flash_attn_kernel, s_actual=S, s_padded=s_pad),
        out_shape=jax.ShapeDtypeStruct((B, s_pad, dv), jnp.bfloat16),
        grid_spec=pltpu.PrefetchScalarGridSpec(
            num_scalar_prefetch=0,
            grid=(B, n_q, n_kv),
            in_specs=[
                pl.BlockSpec((None, tq, dq), lambda b, i, j: (b, i, 0)),  # Q
                pl.BlockSpec((None, tk, dq), lambda b, i, j: (b, j, 0)),  # K
                pl.BlockSpec((None, tk, dv), lambda b, i, j: (b, j, 0)),  # V
            ],
            out_specs=pl.BlockSpec((None, tq, dv), lambda b, i, j: (b, i, 0)),
            scratch_shapes=[
                pltpu.VMEM((tq, 128), jnp.float32),  # running max (lane-repl.)
                pltpu.VMEM((tq, 128), jnp.float32),  # running denom (lane-repl.)
                pltpu.VMEM((tq, dv), jnp.float32),   # output accumulator
            ],
        ),
        compiler_params=compiler_params_2,
    )(q, k, v)

    return out_p[:, :S, :d_v].astype(jnp.float32)


def self_attention_ref(x, wq, bq, wk, bk, wv, bv):
    q = jnp.einsum("bsd,od->bso", x, wq) + bq
    k = jnp.einsum("bsd,od->bso", x, wk) + bk
    v = jnp.einsum("bsd,od->bso", x, wv) + bv
    scores = jnp.einsum("bqo,bko->bqk", q, k) / (wq.shape[0] ** 0.5)
    attn = jax.nn.softmax(scores, axis=-1)
    return jnp.einsum("bqk,bkd->bqd", attn, v)


if __name__ == "__main__":
    B, S, d_in = 2, 8, 32
    d_out_kq, d_out_v = 16, 16

    key = jax.random.PRNGKey(0)
    kx, kq, kbq, kk, kbk, kv, kbv = jax.random.split(key, 7)

    x = jax.random.normal(kx, (B, S, d_in), dtype=jnp.float32)
    # Deterministic "nn.Linear"-style init (uniform in +/- 1/sqrt(d_in)).
    bound = 1.0 / (d_in ** 0.5)
    wq = jax.random.uniform(kq, (d_out_kq, d_in), jnp.float32, -bound, bound)
    bq = jax.random.uniform(kbq, (d_out_kq,), jnp.float32, -bound, bound)
    wk = jax.random.uniform(kk, (d_out_kq, d_in), jnp.float32, -bound, bound)
    bk = jax.random.uniform(kbk, (d_out_kq,), jnp.float32, -bound, bound)
    wv = jax.random.uniform(kv, (d_out_v, d_in), jnp.float32, -bound, bound)
    bv = jax.random.uniform(kbv, (d_out_v,), jnp.float32, -bound, bound)

    out = self_attention(x, wq, bq, wk, bk, wv, bv)
    jax.block_until_ready(out)

    ref = self_attention_ref(x, wq, bq, wk, bk, wv, bv)
    assert out.shape == (B, S, d_out_v)
    # bf16 MXU operands + bf16 output -> loosened tolerance vs f32 ref.
    assert jnp.allclose(out, ref, atol=5e-2, rtol=5e-2)

    print("KERNEL_OK")
</pallas_src>

<mosaic_0001>
module attributes {stable_mosaic.version = 11 : i64} {
  func.func @_qkv_proj_kernel(%arg0: i32, %arg1: memref<16x128xbf16, #tpu.memory_space<vmem>>, %arg2: memref<128x384xbf16, #tpu.memory_space<vmem>>, %arg3: memref<1x384xf32, #tpu.memory_space<vmem>>, %arg4: memref<16x128xbf16, #tpu.memory_space<vmem>>, %arg5: memref<16x128xbf16, #tpu.memory_space<vmem>>, %arg6: memref<16x128xbf16, #tpu.memory_space<vmem>>) attributes {dimension_semantics = [#tpu.dimension_semantics<parallel>], iteration_bounds = array<i64: 1>, scalar_prefetch = 0 : i64, scratch_operands = 0 : i64, tpu.core_type = #tpu.core_type<tc>, window_params = [{transform_indices = @transform_0, window_bounds = array<i64: 16, 128>}, {pipeline_mode = #tpu.pipeline_mode<synchronous>, transform_indices = @transform_1, window_bounds = array<i64: 128, 384>}, {pipeline_mode = #tpu.pipeline_mode<synchronous>, transform_indices = @transform_2, window_bounds = array<i64: 1, 384>}, {transform_indices = @transform_3, window_bounds = array<i64: 16, 128>}, {transform_indices = @transform_4, window_bounds = array<i64: 16, 128>}, {transform_indices = @transform_5, window_bounds = array<i64: 16, 128>}]} {
    %c0 = arith.constant 0 : index
    %c0_0 = arith.constant 0 : index
    %0 = vector.load %arg1[%c0, %c0_0] : memref<16x128xbf16, #tpu.memory_space<vmem>>, vector<16x128xbf16>
    %c0_1 = arith.constant 0 : index
    %c0_2 = arith.constant 0 : index
    %1 = vector.load %arg2[%c0_1, %c0_2] : memref<128x384xbf16, #tpu.memory_space<vmem>>, vector<128x384xbf16>
    %cst = arith.constant dense<0.000000e+00> : vector<16x384xf32>
    %2 = tpu.matmul %0, %1, %cst {dimension_numbers = #tpu.dot_dimension_numbers<[1], [0], [0], [1], [0, 0, 1, 1], [], []>} : vector<16x128xbf16>, vector<128x384xbf16>, vector<16x384xf32> -> vector<16x384xf32>
    %c0_3 = arith.constant 0 : index
    %c0_4 = arith.constant 0 : index
    %3 = vector.load %arg3[%c0_3, %c0_4] : memref<1x384xf32, #tpu.memory_space<vmem>>, vector<1x384xf32>
    %4 = vector.broadcast %3 : vector<1x384xf32> to vector<16x384xf32>
    %5 = arith.addf %2, %4 : vector<16x384xf32>
    %6 = vector.extract_strided_slice %5 {offsets = [0, 0], sizes = [16, 128], strides = [1, 1]} : vector<16x384xf32> to vector<16x128xf32>
    %7 = arith.truncf %6 : vector<16x128xf32> to vector<16x128xbf16>
    %c0_5 = arith.constant 0 : index
    %c0_6 = arith.constant 0 : index
    %8 = vector.load %arg4[%c0_5, %c0_6] : memref<16x128xbf16, #tpu.memory_space<vmem>>, vector<16x128xbf16>
    tpu.vector_store %arg4[%c0_5, %c0_6], %7 {strides = array<i32>} : memref<16x128xbf16, #tpu.memory_space<vmem>>, vector<16x128xbf16>,
    %9 = vector.extract_strided_slice %5 {offsets = [0, 128], sizes = [16, 128], strides = [1, 1]} : vector<16x384xf32> to vector<16x128xf32>
    %10 = arith.truncf %9 : vector<16x128xf32> to vector<16x128xbf16>
    %c0_7 = arith.constant 0 : index
    %c0_8 = arith.constant 0 : index
    %11 = vector.load %arg5[%c0_7, %c0_8] : memref<16x128xbf16, #tpu.memory_space<vmem>>, vector<16x128xbf16>
    tpu.vector_store %arg5[%c0_7, %c0_8], %10 {strides = array<i32>} : memref<16x128xbf16, #tpu.memory_space<vmem>>, vector<16x128xbf16>,
    %12 = vector.extract_strided_slice %5 {offsets = [0, 256], sizes = [16, 128], strides = [1, 1]} : vector<16x384xf32> to vector<16x128xf32>
    %13 = arith.truncf %12 : vector<16x128xf32> to vector<16x128xbf16>
    %c0_9 = arith.constant 0 : index
    %c0_10 = arith.constant 0 : index
    %14 = vector.load %arg6[%c0_9, %c0_10] : memref<16x128xbf16, #tpu.memory_space<vmem>>, vector<16x128xbf16>
    tpu.vector_store %arg6[%c0_9, %c0_10], %13 {strides = array<i32>} : memref<16x128xbf16, #tpu.memory_space<vmem>>, vector<16x128xbf16>,
    return
  }
  func.func @transform_0(%arg0: i32) -> (i32, i32) {
    %c0_i32 = arith.constant 0 : i32
    %c0_i32_0 = arith.constant 0 : i32
    return %arg0, %c0_i32 : i32, i32
  }
  func.func @transform_1(%arg0: i32) -> (i32, i32) {
    %c0_i32 = arith.constant 0 : i32
    %c0_i32_0 = arith.constant 0 : i32
    %c0_i32_1 = arith.constant 0 : i32
    return %c0_i32, %c0_i32_0 : i32, i32
  }
  func.func @transform_2(%arg0: i32) -> (i32, i32) {
    %c0_i32 = arith.constant 0 : i32
    %c0_i32_0 = arith.constant 0 : i32
    %c0_i32_1 = arith.constant 0 : i32
    return %c0_i32, %c0_i32_0 : i32, i32
  }
  func.func @transform_3(%arg0: i32) -> (i32, i32) {
    %c0_i32 = arith.constant 0 : i32
    %c0_i32_0 = arith.constant 0 : i32
    return %arg0, %c0_i32 : i32, i32
  }
  func.func @transform_4(%arg0: i32) -> (i32, i32) {
    %c0_i32 = arith.constant 0 : i32
    %c0_i32_0 = arith.constant 0 : i32
    return %arg0, %c0_i32 : i32, i32
  }
  func.func @transform_5(%arg0: i32) -> (i32, i32) {
    %c0_i32 = arith.constant 0 : i32
    %c0_i32_0 = arith.constant 0 : i32
    return %arg0, %c0_i32 : i32, i32
  }
}

</mosaic_0001>

<llo_original>
// kernel: tpu_custom_call.1
$region0: #{tpu_custom_call.1}
  #allocation0 [shape = 'u32[]', space=smem, size = 0x4, offset = 0x4, fixed_abs, tag = 'smem constant byte address 0x4 - core index']
  #allocation1 [shape = 'u32[72,128]{1,0:T(1,128)}', space=vmem, size = 0x9000, scoped, tag = 'internal scratch']
  %s0 = inlined_call_operand.hbm [shape: bf16[16,128], index: 0, kind: input, shape index: {}]
  %s1 = inlined_call_operand.hbm [shape: bf16[128,384], index: 1, kind: input, shape index: {}]
  %s2 = inlined_call_operand.hbm [shape: f32[1,384], index: 2, kind: input, shape index: {}]
  %s3 = inlined_call_operand.hbm [shape: bf16[16,128], index: 3, kind: output, shape index: {0}]
  %s4 = inlined_call_operand.hbm [shape: bf16[16,128], index: 4, kind: output, shape index: {1}]
  %s5 = inlined_call_operand.hbm [shape: bf16[16,128], index: 5, kind: output, shape index: {2}]
  %6 = xla_tuple %s3, %s4, %s5
  %s7 = sld [smem:[#allocation0]]
  $region50: #{tpu_custom_call.1} parent=0
    _
  %s9 = ssub.s32 1, %s7
  %s10 = scalar_select 0, %s9, %s7
  $region1: #{tpu_custom_call.1} parent=0
    #allocation2 [shape = 'u8[4096]{0}', space=vmem, size = 0x1000, scoped, tag = 'input window, operand 0, single buffered']
    #allocation3 [shape = 's32[1]{0}', space=sflag, size = 0x4, scoped, tag = 'scoped memory for tpu_custom_call.1']
    #allocation4 [shape = 's32[1]{0}', space=sflag, size = 0x4, scoped, tag = 'scoped memory for tpu_custom_call.1']
    #allocation5 [shape = 'u8[98304]{0}', space=vmem, size = 0x18000, scoped, tag = 'input window, operand 1, single buffered']
    #allocation6 [shape = 's32[1]{0}', space=sflag, size = 0x4, scoped, tag = 'scoped memory for tpu_custom_call.1']
    #allocation7 [shape = 'u8[1536]{0}', space=vmem, size = 0x800, scoped, tag = 'input window, operand 2, single buffered']
    #allocation8 [shape = 'u8[4096]{0}', space=vmem, size = 0x1000, scoped, tag = 'output window, operand 0, single buffered']
    #allocation9 [shape = 'u8[4096]{0}', space=vmem, size = 0x1000, scoped, tag = 'output window, operand 1, single buffered']
    #allocation10 [shape = 's32[1]{0}', space=sflag, size = 0x4, scoped, tag = 'scoped memory for tpu_custom_call.1']
    #allocation11 [shape = 'u8[4096]{0}', space=vmem, size = 0x1000, scoped, tag = 'output window, operand 2, single buffered']
    %11 = vsyncpa [#allocation3], 0
    %12 = vsyncpa [#allocation6], 0
    %13 = vsyncpa [#allocation4], 0
    %14 = vsyncpa [#allocation10], 0
    // Predicated region
    $region2: #{tpu_custom_call.1} parent=1 // pred_check
      _
    $region3: #{tpu_custom_call.1} parent=1 // pred_check_branch
      %16 = sbr.rel (0) target = $region5
    $region4: #{tpu_custom_call.1} parent=1 // pred_region
      %18 = vsyncadd [#allocation3], 0
      %s19 = sshll.u32 %s0, 4
      %s20 = int_to_ptr.hbm [resolvable:$true] %s19
      %s21 = sshll.u32 [#allocation2], 4
      %s22 = int_to_ptr.vmem [resolvable:$true] %s21
      %27 = dma.hbm_to_vmem [thread:$0]  %s20, 128, %s22, [#allocation3], 64, 64, 4
    $region5: #{tpu_custom_call.1} parent=1 // pred_fallthru
      _
    // Predicated region
    $region6: #{tpu_custom_call.1} parent=1 // pred_check
      _
    $region7: #{tpu_custom_call.1} parent=1 // pred_check_branch
      %29 = sbr.rel (0) target = $region9
    $region8: #{tpu_custom_call.1} parent=1 // pred_region
      %31 = vsyncadd [#allocation6], 0
      %s32 = sshll.u32 %s1, 4
      %s33 = int_to_ptr.hbm [resolvable:$true] %s32
      %s34 = sshll.u32 [#allocation5], 4
      %s35 = int_to_ptr.vmem [resolvable:$true] %s34
      %40 = dma.hbm_to_vmem [thread:$0]  %s33, 3072, %s35, [#allocation6], 192, 192, 12
    $region9: #{tpu_custom_call.1} parent=1 // pred_fallthru
      _
    // Predicated region
    $region10: #{tpu_custom_call.1} parent=1 // pred_check
      _
    $region11: #{tpu_custom_call.1} parent=1 // pred_check_branch
      %42 = sbr.rel (0) target = $region13
    $region12: #{tpu_custom_call.1} parent=1 // pred_region
      %44 = vsyncadd [#allocation6], 0
      %s46 = sshll.u32 %s2, 4
      %s47 = int_to_ptr.hbm [resolvable:$true] %s46
      %s48 = sshll.u32 [#allocation7], 4
      %s49 = int_to_ptr.vmem [resolvable:$true] %s48
      %51 = dma.hbm_to_vmem [thread:$0]  %s47, 48, %s49, [#allocation6]
    $region13: #{tpu_custom_call.1} parent=1 // pred_fallthru
      _
    // Predicated region
    $region14: #{tpu_custom_call.1} parent=1 // pred_check
      _
    $region15: #{tpu_custom_call.1} parent=1 // pred_check_branch
      %53 = sbr.rel (0) target = $region17
    $region16: #{tpu_custom_call.1} parent=1 // pred_region
      %55 = dma.done [#allocation3], 128
    $region17: #{tpu_custom_call.1} parent=1 // pred_fallthru
      _
    // Predicated region
    $region18: #{tpu_custom_call.1} parent=1 // pred_check
      _
    $region19: #{tpu_custom_call.1} parent=1 // pred_check_branch
      %57 = sbr.rel (0) target = $region21
    $region20: #{tpu_custom_call.1} parent=1 // pred_region
      %59 = dma.done [#allocation6], 3072
    $region21: #{tpu_custom_call.1} parent=1 // pred_fallthru
      _
    // Predicated region
    $region22: #{tpu_custom_call.1} parent=1 // pred_check
      _
    $region23: #{tpu_custom_call.1} parent=1 // pred_check_branch
      %61 = sbr.rel (0) target = $region25
    $region24: #{tpu_custom_call.1} parent=1 // pred_region
      %63 = dma.done [#allocation6], 48
    $region25: #{tpu_custom_call.1} parent=1 // pred_fallthru
      _
    %v64 = vld [vmem:[#allocation2] sm:$0xf]
    %v65 = vld [vmem:[#allocation2 + $0x4] sm:$0xf]
    %v66 = vld [vmem:[#allocation5] sm:$0xff]
    %v67 = vld [vmem:[#allocation5 + $0x8] sm:$0xf]
    %v68 = vld [vmem:[#allocation5 + $0xc] sm:$0xff]
    %v69 = vld [vmem:[#allocation5 + $0x14] sm:$0xf]
    %v70 = vld [vmem:[#allocation5 + $0x18] sm:$0xff]
    %v71 = vld [vmem:[#allocation5 + $0x20] sm:$0xf]
    %v72 = vld [vmem:[#allocation5 + $0x24] sm:$0xff]
    %v73 = vld [vmem:[#allocation5 + $0x2c] sm:$0xf]
    %v74 = vld [vmem:[#allocation5 + $0x30] sm:$0xff]
    %v75 = vld [vmem:[#allocation5 + $0x38] sm:$0xf]
    %v76 = vld [vmem:[#allocation5 + $0x3c] sm:$0xff]
    %v77 = vld [vmem:[#allocation5 + $0x44] sm:$0xf]
    %v78 = vld [vmem:[#allocation5 + $0x48] sm:$0xff]
    %v79 = vld [vmem:[#allocation5 + $0x50] sm:$0xf]
    %v80 = vld [vmem:[#allocation5 + $0x54] sm:$0xff]
    %v81 = vld [vmem:[#allocation5 + $0x5c] sm:$0xf]
    %v82 = vld [vmem:[#allocation5 + $0x60] sm:$0xff]
    %v83 = vld [vmem:[#allocation5 + $0x68] sm:$0xf]
    %v84 = vld [vmem:[#allocation5 + $0x6c] sm:$0xff]
    %v85 = vld [vmem:[#allocation5 + $0x74] sm:$0xf]
    %v86 = vld [vmem:[#allocation5 + $0x78] sm:$0xff]
    %v87 = vld [vmem:[#allocation5 + $0x80] sm:$0xf]
    %v88 = vld [vmem:[#allocation5 + $0x84] sm:$0xff]
    %v89 = vld [vmem:[#allocation5 + $0x8c] sm:$0xf]
    %v90 = vld [vmem:[#allocation5 + $0x90] sm:$0xff]
    %v91 = vld [vmem:[#allocation5 + $0x98] sm:$0xf]
    %v92 = vld [vmem:[#allocation5 + $0x9c] sm:$0xff]
    %v93 = vld [vmem:[#allocation5 + $0xa4] sm:$0xf]
    %v94 = vld [vmem:[#allocation5 + $0xa8] sm:$0xff]
    %v95 = vld [vmem:[#allocation5 + $0xb0] sm:$0xf]
    %v96 = vld [vmem:[#allocation5 + $0xb4] sm:$0xff]
    %v97 = vld [vmem:[#allocation5 + $0xbc] sm:$0xf]
    %v98 = vld [vmem:[#allocation7] sm:$0x7]
    %v100 = vperm.slane %v98, 0
    %v101 = vperm.slane %v98, 1
    %v102 = vperm.slane %v98, 2
    %v108 = vunpack.c.l.b16 %v64
    %v109 = vunpack.c.l.b16 %v65
    %v110 = vpack.c.b16 %v109, %v108
    %v144 = vunpack.c.l.b16 %v66
    %v145 = vunpack.c.h.b16 %v66
    %v146 = vunpack.c.l.b16 %v67
    %v147 = vunpack.c.l.b16 %v68
    %v148 = vunpack.c.h.b16 %v68
    %v149 = vunpack.c.l.b16 %v69
    %v150 = vunpack.c.l.b16 %v70
    %v151 = vunpack.c.h.b16 %v70
    %v152 = vunpack.c.l.b16 %v71
    %v153 = vunpack.c.l.b16 %v72
    %v154 = vunpack.c.h.b16 %v72
    %v155 = vunpack.c.l.b16 %v73
    %v156 = vunpack.c.l.b16 %v74
    %v157 = vunpack.c.h.b16 %v74
    %v158 = vunpack.c.l.b16 %v75
    %v159 = vunpack.c.l.b16 %v76
    %v160 = vunpack.c.h.b16 %v76
    %v161 = vunpack.c.l.b16 %v77
    %v162 = vunpack.c.l.b16 %v78
    %v163 = vunpack.c.h.b16 %v78
    %v164 = vunpack.c.l.b16 %v79
    %v165 = vunpack.c.l.b16 %v80
    %v166 = vunpack.c.h.b16 %v80
    %v167 = vunpack.c.l.b16 %v81
    %v168 = vunpack.c.l.b16 %v82
    %v169 = vunpack.c.h.b16 %v82
    %v170 = vunpack.c.l.b16 %v83
    %v171 = vunpack.c.l.b16 %v84
    %v172 = vunpack.c.h.b16 %v84
    %v173 = vunpack.c.l.b16 %v85
    %v174 = vunpack.c.l.b16 %v86
    %v175 = vunpack.c.h.b16 %v86
    %v176 = vunpack.c.l.b16 %v87
    %v177 = vunpack.c.l.b16 %v88
    %v178 = vunpack.c.h.b16 %v88
    %v179 = vunpack.c.l.b16 %v89
    %v180 = vunpack.c.l.b16 %v90
    %v181 = vunpack.c.h.b16 %v90
    %v182 = vunpack.c.l.b16 %v91
    %v183 = vunpack.c.l.b16 %v92
    %v184 = vunpack.c.h.b16 %v92
    %v185 = vunpack.c.l.b16 %v93
    %v186 = vunpack.c.l.b16 %v94
    %v187 = vunpack.c.h.b16 %v94
    %v188 = vunpack.c.l.b16 %v95
    %v189 = vunpack.c.l.b16 %v96
    %v190 = vunpack.c.h.b16 %v96
    %v191 = vunpack.c.l.b16 %v97
    %v192 = vpack.c.b16 %v147, %v144
    %v193 = vpack.c.b16 %v148, %v145
    %v194 = vpack.c.b16 %v149, %v146
    %v195 = vpack.c.b16 %v153, %v150
    %v196 = vpack.c.b16 %v154, %v151
    %v197 = vpack.c.b16 %v155, %v152
    %v198 = vpack.c.b16 %v159, %v156
    %v199 = vpack.c.b16 %v160, %v157
    %v200 = vpack.c.b16 %v161, %v158
    %v201 = vpack.c.b16 %v165, %v162
    %v202 = vpack.c.b16 %v166, %v163
    %v203 = vpack.c.b16 %v167, %v164
    %v204 = vpack.c.b16 %v171, %v168
    %v205 = vpack.c.b16 %v172, %v169
    %v206 = vpack.c.b16 %v173, %v170
    %v207 = vpack.c.b16 %v177, %v174
    %v208 = vpack.c.b16 %v178, %v175
    %v209 = vpack.c.b16 %v179, %v176
    %v210 = vpack.c.b16 %v183, %v180
    %v211 = vpack.c.b16 %v184, %v181
    %v212 = vpack.c.b16 %v185, %v182
    %v213 = vpack.c.b16 %v189, %v186
    %v214 = vpack.c.b16 %v190, %v187
    %v215 = vpack.c.b16 %v191, %v188
    %240 = vmatpush.bf16.msra.mxu0 %v213
    %241 = vmatpush.bf16.msra.mxu0 %v210
    %242 = vmatpush.bf16.msra.mxu0 %v207
    %243 = vmatpush.bf16.msra.mxu0 %v204
    %244 = vmatpush.bf16.msra.mxu0 %v201
    %245 = vmatpush.bf16.msra.mxu0 %v198
    %246 = vmatpush.bf16.msra.mxu0 %v195
    %247 = vmatpush.bf16.msra.mxu0 %v192
    %248 = vmatmul.bf16.gmra.mxu0 %v110
    %v249 = vpop.f32.mrf.mxu0
    %v250 = vadd.f32 %v100, %v249
    %v251 = vpop.f32.mrf.mxu0
    %v252 = vadd.f32 %v100, %v251
    %253 = vdwg.mxu0
    %254 = vmatpush.bf16.msra.mxu0 %v214
    %255 = vmatpush.bf16.msra.mxu0 %v211
    %256 = vmatpush.bf16.msra.mxu0 %v208
    %257 = vmatpush.bf16.msra.mxu0 %v205
    %258 = vmatpush.bf16.msra.mxu0 %v202
    %259 = vmatpush.bf16.msra.mxu0 %v199
    %260 = vmatpush.bf16.msra.mxu0 %v196
    %261 = vmatpush.bf16.msra.mxu0 %v193
    %262 = vmatmul.bf16.gmra.mxu0 %v110
    %v263 = vpop.f32.mrf.mxu0
    %v264 = vadd.f32 %v101, %v263
    %v265 = vpop.f32.mrf.mxu0
    %v266 = vadd.f32 %v101, %v265
    %267 = vdwg.mxu0
    %268 = vmatpush.bf16.msra.mxu0 %v215
    %269 = vmatpush.bf16.msra.mxu0 %v212
    %270 = vmatpush.bf16.msra.mxu0 %v209
    %271 = vmatpush.bf16.msra.mxu0 %v206
    %272 = vmatpush.bf16.msra.mxu0 %v203
    %273 = vmatpush.bf16.msra.mxu0 %v200
    %274 = vmatpush.bf16.msra.mxu0 %v197
    %275 = vmatpush.bf16.msra.mxu0 %v194
    %276 = vmatmul.bf16.gmra.mxu0 %v110
    %v277 = vpop.f32.mrf.mxu0
    %v278 = vadd.f32 %v102, %v277
    %v279 = vpop.f32.mrf.mxu0
    %v280 = vadd.f32 %v102, %v279
    %281 = vdwg.mxu0
    %v282 = vpack.c.bf16 %v250, %v250
    %v283 = vpack.c.bf16 %v252, %v252
    %284 = vst [vmem:[#allocation8] sm:$0xf] %v282
    %285 = vst [vmem:[#allocation8 + $0x4] sm:$0xf] %v283
    %v286 = vpack.c.bf16 %v264, %v264
    %v287 = vpack.c.bf16 %v266, %v266
    %288 = vst [vmem:[#allocation9] sm:$0xf] %v286
    %289 = vst [vmem:[#allocation9 + $0x4] sm:$0xf] %v287
    %v290 = vpack.c.bf16 %v278, %v278
    %v291 = vpack.c.bf16 %v280, %v280
    %292 = vst [vmem:[#allocation11] sm:$0xf] %v290
    %293 = vst [vmem:[#allocation11 + $0x4] sm:$0xf] %v291
    // Predicated region
    $region26: #{tpu_custom_call.1} parent=1 // pred_check
      _
    $region27: #{tpu_custom_call.1} parent=1 // pred_check_branch
      %295 = sbr.rel (0) target = $region29
    $region28: #{tpu_custom_call.1} parent=1 // pred_region
      %297 = vsyncadd [#allocation4], 0
      %s298 = sshll.u32 [#allocation8], 4
      %s299 = int_to_ptr.vmem [resolvable:$true] %s298
      %s300 = sshll.u32 %s3, 4
      %s301 = int_to_ptr.hbm [resolvable:$true] %s300
      %306 = dma.vmem_to_hbm [thread:$0]  %s299, 128, %s301, [#allocation4], 64, 64, 4
    $region29: #{tpu_custom_call.1} parent=1 // pred_fallthru
      _
    // Predicated region
    $region30: #{tpu_custom_call.1} parent=1 // pred_check
      _
    $region31: #{tpu_custom_call.1} parent=1 // pred_check_branch
      %308 = sbr.rel (0) target = $region33
    $region32: #{tpu_custom_call.1} parent=1 // pred_region
      %310 = vsyncadd [#allocation10], 0
      %s311 = sshll.u32 [#allocation9], 4
      %s312 = int_to_ptr.vmem [resolvable:$true] %s311
      %s313 = sshll.u32 %s4, 4
      %s314 = int_to_ptr.hbm [resolvable:$true] %s313
      %319 = dma.vmem_to_hbm [thread:$0]  %s312, 128, %s314, [#allocation10], 64, 64, 4
    $region33: #{tpu_custom_call.1} parent=1 // pred_fallthru
      _
    // Predicated region
    $region34: #{tpu_custom_call.1} parent=1 // pred_check
      _
    $region35: #{tpu_custom_call.1} parent=1 // pred_check_branch
      %321 = sbr.rel (0) target = $region37
    $region36: #{tpu_custom_call.1} parent=1 // pred_region
      %323 = vsyncadd [#allocation10], 0
      %s324 = sshll.u32 [#allocation11], 4
      %s325 = int_to_ptr.vmem [resolvable:$true] %s324
      %s326 = sshll.u32 %s5, 4
      %s327 = int_to_ptr.hbm [resolvable:$true] %s326
      %332 = dma.vmem_to_hbm [thread:$0]  %s325, 128, %s327, [#allocation10], 64, 64, 4
    $region37: #{tpu_custom_call.1} parent=1 // pred_fallthru
      _
    // Predicated region
    $region38: #{tpu_custom_call.1} parent=1 // pred_check
      _
    $region39: #{tpu_custom_call.1} parent=1 // pred_check_branch
      %334 = sbr.rel (0) target = $region41
    $region40: #{tpu_custom_call.1} parent=1 // pred_region
      %336 = dma.done [#allocation4], 128
    $region41: #{tpu_custom_call.1} parent=1 // pred_fallthru
      _
    // Predicated region
    $region42: #{tpu_custom_call.1} parent=1 // pred_check
      _
    $region43: #{tpu_custom_call.1} parent=1 // pred_check_branch
      %338 = sbr.rel (0) target = $region45
    $region44: #{tpu_custom_call.1} parent=1 // pred_region
      %340 = dma.done [#allocation10], 128
    $region45: #{tpu_custom_call.1} parent=1 // pred_fallthru
      _
    // Predicated region
    $region46: #{tpu_custom_call.1} parent=1 // pred_check
      _
    $region47: #{tpu_custom_call.1} parent=1 // pred_check_branch
      %342 = sbr.rel (0) target = $region49
    $region48: #{tpu_custom_call.1} parent=1 // pred_region
      %344 = dma.done [#allocation10], 128
    $region49: #{tpu_custom_call.1} parent=1 // pred_fallthru
      _
    %345 = vsyncpa [#allocation3], 1
    %346 = vsyncpa [#allocation6], 1
    %347 = vsyncpa [#allocation4], 1
    %348 = vsyncpa [#allocation10], 1

</llo_original>
